<compile_context>
chip_gen: v6e
topology: v6e:2x2x1
jax: 0.10.0
libtpu: 0.0.40
codegen_flags: <defaults>
</compile_context>

<pallas_src>
import jax
import jax.numpy as jnp
from jax.experimental import pallas as pl
from jax.experimental.pallas import tpu as pltpu


def _spatial_pool_kernel(w_ref, x_ref, o_ref):
    # w_ref: (bk, N)   x_ref: (1, N, bc)   o_ref: (1, bk, bc)
    w = w_ref[...].astype(jnp.float32)

    # Row softmax over the full seq_len axis (lanes).
    m = jnp.max(w, axis=-1, keepdims=True)
    e = jnp.exp(w - m)
    denom = jnp.sum(e, axis=-1, keepdims=True)
    attn = e * pl.reciprocal(denom, approx=True)           # EUP, ~free

    x = x_ref[0]                                            # (N, bc)
    # MXU contraction; cast attn to the input dtype (bf16-friendly), accumulate f32.
    out = jnp.dot(attn.astype(x.dtype), x, preferred_element_type=jnp.float32)
    o_ref[0] = out.astype(o_ref.dtype)


def spatial_pool(x: jax.Array,
                 weight: jax.Array,
                 *,
                 block_k: int = 128,
                 block_c: int = 512,
                 out_dtype=None) -> jax.Array:
    """Pallas implementation of SpatialPool.forward().

    x:      (B, N, C) input features.
    weight: (K, N) learned per-class attention logits.
    Returns (B, K, C) pooled features (dtype = x.dtype unless overridden).
    """
    B, N, C = x.shape
    K, Nw = weight.shape
    assert Nw == N, "weight seq_len must match input seq_len"
    out_dtype = x.dtype if out_dtype is None else out_dtype

    # Class (sublane) tile: whole K if it fits, otherwise a multiple of 8.
    if K <= block_k:
        bk = K
    else:
        bk = max(8, (block_k // 8) * 8)

    # Channel (lane) tile: whole C if it fits, otherwise a multiple of 128.
    if C <= block_c:
        bc = C
    else:
        bc = max(128, (block_c // 128) * 128)

    grid = (B, pl.cdiv(K, bk), pl.cdiv(C, bc))

    return pl.pallas_call(
        _spatial_pool_kernel,
        out_shape=jax.ShapeDtypeStruct((B, K, C), out_dtype),
        grid_spec=pltpu.PrefetchScalarGridSpec(
            num_scalar_prefetch=0,
            grid=grid,
            in_specs=[
                # weight tile: same block across b and c-tiles (no re-DMA while kt fixed)
                pl.BlockSpec((bk, N), lambda b, k, c: (k, 0)),
                # input tile: full seq_len, lane-dense channel slab
                pl.BlockSpec((1, N, bc), lambda b, k, c: (b, 0, c)),
            ],
            out_specs=pl.BlockSpec((1, bk, bc), lambda b, k, c: (b, k, c)),
        ),
        compiler_params=pltpu.CompilerParams(
            dimension_semantics=("parallel", "parallel", "parallel"),
        ),
    )(weight, x)


def _reference(x, weight):
    attn = jax.nn.softmax(weight.astype(jnp.float32), axis=1)
    return jnp.einsum("kn,bnc->bkc", attn, x.astype(jnp.float32)).astype(x.dtype)


if __name__ == "__main__":
    # Small shapes consistent with the module: B=2, seq_len N=16, C=32, K=4 classes.
    B, N, C, K = 2, 16, 32, 4
    key = jax.random.PRNGKey(0)
    kw, kx = jax.random.split(key)

    # reset_parameters(): trunc_normal_(weight, std=0.2)
    weight = 0.2 * jax.random.truncated_normal(kw, -2.0, 2.0, (K, N), dtype=jnp.float32)
    x = jax.random.normal(kx, (B, N, C), dtype=jnp.float32)

    out = spatial_pool(x, weight)
    out = jax.block_until_ready(out)

    ref = _reference(x, weight)
    assert out.shape == (B, K, C)
    # approx reciprocal in the softmax denom -> ~2^-12 relative error budget.
    assert jnp.allclose(out, ref, atol=2e-3, rtol=2e-3), "mismatch vs reference"

    print("KERNEL_OK")
</pallas_src>

<mosaic_0001>
module attributes {stable_mosaic.version = 11 : i64} {
  func.func @_spatial_pool_kernel(%arg0: i32, %arg1: i32, %arg2: i32, %arg3: memref<4x16xf32, #tpu.memory_space<vmem>>, %arg4: memref<1x16x32xf32, #tpu.memory_space<vmem>>, %arg5: memref<1x4x32xf32, #tpu.memory_space<vmem>>) attributes {dimension_semantics = [#tpu.dimension_semantics<parallel>, #tpu.dimension_semantics<parallel>, #tpu.dimension_semantics<parallel>], iteration_bounds = array<i64: 2, 1, 1>, scalar_prefetch = 0 : i64, scratch_operands = 0 : i64, tpu.core_type = #tpu.core_type<tc>, window_params = [{transform_indices = @transform_0, window_bounds = array<i64: 4, 16>}, {transform_indices = @transform_1, window_bounds = array<i64: 1, 16, 32>}, {transform_indices = @transform_2, window_bounds = array<i64: 1, 4, 32>}]} {
    %c0 = arith.constant 0 : index
    %c0_0 = arith.constant 0 : index
    %0 = vector.load %arg3[%c0, %c0_0] : memref<4x16xf32, #tpu.memory_space<vmem>>, vector<4x16xf32>
    %cst = arith.constant dense<0xFF800000> : vector<4xf32>
    %1 = vector.multi_reduction <maximumf>, %0, %cst [1] : vector<4x16xf32> to vector<4xf32>
    %2 = vector.shape_cast %1 : vector<4xf32> to vector<4x1xf32>
    %3 = vector.broadcast %2 : vector<4x1xf32> to vector<4x16xf32>
    %4 = arith.subf %0, %3 : vector<4x16xf32>
    %5 = math.exp %4 : vector<4x16xf32>
    %cst_1 = arith.constant dense<0.000000e+00> : vector<4xf32>
    %6 = vector.multi_reduction <add>, %5, %cst_1 [1] : vector<4x16xf32> to vector<4xf32>
    %7 = vector.shape_cast %6 : vector<4xf32> to vector<4x1xf32>
    %8 = tpu.reciprocal %7 {approx = true} : vector<4x1xf32> -> vector<4x1xf32>
    %9 = vector.broadcast %8 : vector<4x1xf32> to vector<4x16xf32>
    %10 = arith.mulf %5, %9 : vector<4x16xf32>
    %c0_2 = arith.constant 0 : index
    %c0_3 = arith.constant 0 : index
    %c0_4 = arith.constant 0 : index
    %11 = vector.load %arg4[%c0_2, %c0_3, %c0_4] : memref<1x16x32xf32, #tpu.memory_space<vmem>>, vector<1x16x32xf32>
    %12 = vector.shape_cast %11 : vector<1x16x32xf32> to vector<16x32xf32>
    %cst_5 = arith.constant dense<0.000000e+00> : vector<4x32xf32>
    %13 = tpu.matmul %10, %12, %cst_5 {dimension_numbers = #tpu.dot_dimension_numbers<[1], [0], [0], [1], [0, 0, 1, 1], [], []>} : vector<4x16xf32>, vector<16x32xf32>, vector<4x32xf32> -> vector<4x32xf32>
    %c0_6 = arith.constant 0 : index
    %c0_7 = arith.constant 0 : index
    %c0_8 = arith.constant 0 : index
    %14 = vector.load %arg5[%c0_6, %c0_7, %c0_8] : memref<1x4x32xf32, #tpu.memory_space<vmem>>, vector<1x4x32xf32>
    %15 = vector.shape_cast %14 : vector<1x4x32xf32> to vector<4x32xf32>
    %16 = vector.shape_cast %13 : vector<4x32xf32> to vector<1x4x32xf32>
    tpu.vector_store %arg5[%c0_6, %c0_7, %c0_8], %16 {strides = array<i32>} : memref<1x4x32xf32, #tpu.memory_space<vmem>>, vector<1x4x32xf32>,
    return
  }
  func.func @transform_0(%arg0: i32, %arg1: i32, %arg2: i32) -> (i32, i32) {
    %c0_i32 = arith.constant 0 : i32
    %c0_i32_0 = arith.constant 0 : i32
    return %arg1, %c0_i32 : i32, i32
  }
  func.func @transform_1(%arg0: i32, %arg1: i32, %arg2: i32) -> (i32, i32, i32) {
    %c0_i32 = arith.constant 0 : i32
    %c0_i32_0 = arith.constant 0 : i32
    return %arg0, %c0_i32, %arg2 : i32, i32, i32
  }
  func.func @transform_2(%arg0: i32, %arg1: i32, %arg2: i32) -> (i32, i32, i32) {
    %c0_i32 = arith.constant 0 : i32
    return %arg0, %arg1, %arg2 : i32, i32, i32
  }
}

</mosaic_0001>

<llo_original>
// kernel: tpu_custom_call.1
$region0: #{tpu_custom_call.1}
  #allocation0 [shape = 'u32[]', space=smem, size = 0x4, offset = 0x4, fixed_abs, tag = 'smem constant byte address 0x4 - core index']
  #allocation1 [shape = 'u32[144,128]{1,0:T(1,128)}', space=vmem, size = 0x12000, scoped, tag = 'internal scratch']
  %s0 = inlined_call_operand.hbm [shape: f32[4,16], index: 0, kind: input, shape index: {}]
  %s1 = inlined_call_operand.hbm [shape: f32[2,16,32], index: 1, kind: input, shape index: {}]
  %s2 = inlined_call_operand.hbm [shape: f32[2,4,32], index: 2, kind: output, shape index: {}]
  %s3 = sld [smem:[#allocation0]]
  $region49: #{tpu_custom_call.1} parent=0
    _
  %s5 = ssub.s32 1, %s3
  %s6 = scalar_select 0, %s5, %s3
  $region1: #{tpu_custom_call.1} parent=0
    #allocation2 [shape = 'u8[2048]{0}', space=vmem, size = 0x800, scoped, tag = 'input window, operand 0, single buffered']
    #allocation3 [shape = 's32[2]{0}', space=sflag, size = 0x8, scoped, tag = 'scoped memory for tpu_custom_call.1']
    #allocation4 [shape = 's32[2]{0}', space=sflag, size = 0x8, scoped, tag = 'scoped memory for tpu_custom_call.1']
    #allocation5 [shape = 'u8[16384]{0}', space=vmem, size = 0x4000, scoped, tag = 'input window, operand 1']
    #allocation6 [shape = 's32[2]{0}', space=sflag, size = 0x8, scoped, tag = 'scoped memory for tpu_custom_call.1']
    #allocation7 [shape = 'u8[4096]{0}', space=vmem, size = 0x1000, scoped, tag = 'output window, operand 0']
    %7 = vsyncpa [#allocation3], 0
    %8 = vsyncpa [#allocation6], 0
    %s9 = scalar_lea.sflag [#allocation6], 1
    %10 = vsyncpa %s9, 0
    %11 = vsyncpa [#allocation4], 0
    %s12 = scalar_lea.sflag [#allocation4], 1
    %13 = vsyncpa %s12, 0
    loop: start=0, step=1, limit=4
    $region2: #{tpu_custom_call.1} parent=1 // loop_pre_header
      _
    $region3: #{tpu_custom_call.1} parent=1 // loop_header
      %s15 = sphi 0, %s19
      %p16 = scmp.ge.s32.totalorder %s15, 4
      %s22 = sphi 0, %s41
      %s23 = sphi 0, %s37
      %s24 = sphi 0, %s33
      %s25 = sphi 0, %s22
      %s26 = sphi 0, %s23
      %s27 = sphi 0, %s24
      %s28 = sphi 0, %s25
      %s29 = sphi 0, %s26
      %s30 = sphi 0, %s27
      %s44 = sphi 0, %s46
      %s47 = sphi 0, %s44
      %s48 = sphi 0, %s47
      %s64 = sphi 0, %s48
      %s72 = sphi 0, %s74
      %s75 = sphi 0, %s72
      %s76 = sphi 0, %s75
      %s92 = sphi 0, %s76
      %s102 = sphi 0, %s104
      %s105 = sphi 0, %s102
      %s106 = sphi 0, %s105
      %s122 = sphi 0, %s106
    $region4: #{tpu_custom_call.1} parent=1 // loop_header_branch
      %18 = sbr.rel (%p16) target = $region8
    $region5: #{tpu_custom_call.1} parent=1 // loop_body
      %s20 = ssub.s32 %s15, 1
      %s21 = ssub.s32 %s15, 2
      %s31 = sadd.s32 1, %s24
      %p32 = scmp.ge.s32.totalorder %s31, 1
      %s33 = scalar_select %p32, 0, %s31
      %s34 = sadd.s32 1, %s23
      %s35 = scalar_select %p32, %s34, %s23
      %p36 = scmp.ge.s32.totalorder %s35, 1
      %s37 = scalar_select %p36, 0, %s35
      %s38 = sadd.s32 1, %s22
      %s39 = scalar_select %p36, %s38, %s22
      %p40 = scmp.ge.s32.totalorder %s39, 2
      %s41 = scalar_select %p40, 0, %s39
      %s42 = ssub.s32 %s23, %s37
      %p43 = scmp.eq.s32.totalorder %s42, 0
      %s45 = sadd.s32 %s44, 1
      %s46 = scalar_select %p43, %s44, %s45
      %p49 = pneg %p43
      %p50 = scmp.eq.s32.totalorder %s15, 1
      %p51 = por %p49, %p50
      %p52 = scmp.ne.s32.totalorder %s44, %s47
      %p53 = scmp.eq.s32.totalorder %s15, 0
      %p54 = por %p52, %p53
      %p55 = scmp.ne.s32.totalorder %s44, %s47
      %p56 = scmp.eq.s32.totalorder %s20, 1
      %p57 = por %p55, %p56
      %p58 = scmp.ne.s32.totalorder %s47, %s48
      %p59 = scmp.eq.s32.totalorder %s20, 0
      %p60 = por %p58, %p59
      %p61 = scmp.ne.s32.totalorder %s47, %s48
      %p62 = scmp.eq.s32.totalorder %s21, 1
      %p63 = por %p61, %p62
      %p65 = scmp.ne.s32.totalorder %s48, %s64
      %p66 = scmp.eq.s32.totalorder %s21, 0
      %p67 = por %p65, %p66
      %s68 = ssub.s32 %s22, %s41
      %s69 = ssub.s32 %s24, %s33
      %s70 = sor.u32 %s68, %s69
      %p71 = scmp.eq.s32.totalorder %s70, 0
      %s73 = sadd.s32 %s72, 1
      %s74 = scalar_select %p71, %s72, %s73
      %p77 = pneg %p71
      %p78 = scmp.eq.s32.totalorder %s15, 1
      %p79 = por %p77, %p78
      %p80 = scmp.ne.s32.totalorder %s72, %s75
      %p81 = scmp.eq.s32.totalorder %s15, 0
      %p82 = por %p80, %p81
      %p83 = scmp.ne.s32.totalorder %s72, %s75
      %p84 = scmp.eq.s32.totalorder %s20, 1
      %p85 = por %p83, %p84
      %p86 = scmp.ne.s32.totalorder %s75, %s76
      %p87 = scmp.eq.s32.totalorder %s20, 0
      %p88 = por %p86, %p87
      %p89 = scmp.ne.s32.totalorder %s75, %s76
      %p90 = scmp.eq.s32.totalorder %s21, 1
      %p91 = por %p89, %p90
      %p93 = scmp.ne.s32.totalorder %s76, %s92
      %p94 = scmp.eq.s32.totalorder %s21, 0
      %p95 = por %p93, %p94
      %s96 = ssub.s32 %s22, %s41
      %s97 = ssub.s32 %s23, %s37
      %s98 = sor.u32 %s96, %s97
      %s99 = ssub.s32 %s24, %s33
      %s100 = sor.u32 %s98, %s99
      %p101 = scmp.eq.s32.totalorder %s100, 0
      %s103 = sadd.s32 %s102, 1
      %s104 = scalar_select %p101, %s102, %s103
      %p107 = pneg %p101
      %p108 = scmp.eq.s32.totalorder %s15, 1
      %p109 = por %p107, %p108
      %p110 = scmp.ne.s32.totalorder %s102, %s105
      %p111 = scmp.eq.s32.totalorder %s15, 0
      %p112 = por %p110, %p111
      %p113 = scmp.ne.s32.totalorder %s102, %s105
      %p114 = scmp.eq.s32.totalorder %s20, 1
      %p115 = por %p113, %p114
      %p116 = scmp.ne.s32.totalorder %s105, %s106
      %p117 = scmp.eq.s32.totalorder %s20, 0
      %p118 = por %p116, %p117
      %p119 = scmp.ne.s32.totalorder %s105, %s106
      %p120 = scmp.eq.s32.totalorder %s21, 1
      %p121 = por %p119, %p120
      %p123 = scmp.ne.s32.totalorder %s106, %s122
      %p124 = scmp.eq.s32.totalorder %s21, 0
      %p125 = por %p123, %p124
      %p126 = scmp.le.s32.totalorder 1, %s15
      %p127 = scmp.lt.s32.totalorder %s15, 3
      %p128 = pnand %p126, %p127
      %p129 = pneg %p128
      // Predicated region
      $region9: #{tpu_custom_call.1} parent=5 // pred_check
        _
      $region10: #{tpu_custom_call.1} parent=5 // pred_check_branch
        %131 = sbr.rel (%p128) target = $region12
      $region11: #{tpu_custom_call.1} parent=5 // pred_region
        %s132 = ssub.s32 %s15, 1
        // Predicated region
        $region13: #{tpu_custom_call.1} parent=11 // pred_check
          %p133 = pneg %p60
        $region14: #{tpu_custom_call.1} parent=11 // pred_check_branch
          %135 = sbr.rel (%p133) target = $region16
        $region15: #{tpu_custom_call.1} parent=11 // pred_region
          %s137 = ssub.s32 64, 64
          %138 = vsyncadd [#allocation3], %s137
          %s139 = smul.addr %s26, 64
          %s140 = scalar_lea.hbm %s0, %s139
          %s142 = sshll.u32 [#allocation2], 4
          %s143 = int_to_ptr.vmem [resolvable:$true] %s142
          %145 = dma.hbm_to_vmem [thread:$0]  %s140, 64, %s143, [#allocation3]
        $region16: #{tpu_custom_call.1} parent=11 // pred_fallthru
          _
      $region12: #{tpu_custom_call.1} parent=5 // pred_fallthru
        _
      %p146 = scmp.lt.s32.totalorder %s15, 2
      // Predicated region
      $region17: #{tpu_custom_call.1} parent=5 // pred_check
        %p147 = pneg %p146
      $region18: #{tpu_custom_call.1} parent=5 // pred_check_branch
        %149 = sbr.rel (%p147) target = $region20
      $region19: #{tpu_custom_call.1} parent=5 // pred_region
        // Predicated region
        $region21: #{tpu_custom_call.1} parent=19 // pred_check
          %p150 = pneg %p82
        $region22: #{tpu_custom_call.1} parent=19 // pred_check_branch
          %152 = sbr.rel (%p150) target = $region24
        $region23: #{tpu_custom_call.1} parent=19 // pred_region
          %s153 = sand.u32 %s72, 1
          %s154 = scalar_lea.sflag [#allocation6], %s153
          %s155 = sand.u32 %s72, 1
          %s156 = smul.addr %s155, 16
          %s157 = scalar_lea.vmem [#allocation5], %s156
          %s159 = ssub.s32 256, 256
          %160 = vsyncadd %s154, %s159
          %s161 = smul.addr %s22, 2
          %s162 = sadd.s32 %s24, %s161
          %s163 = smul.addr %s162, 128
          %s164 = scalar_lea.hbm %s1, %s163
          %s165 = sshll.u32 %s157, 4
          %s166 = int_to_ptr.vmem [resolvable:$true] %s165
          %171 = dma.hbm_to_vmem [thread:$0]  %s164, 256, %s166, %s154, 128, 128, 8
        $region24: #{tpu_custom_call.1} parent=19 // pred_fallthru
          _
      $region20: #{tpu_custom_call.1} parent=5 // pred_fallthru
        _
      %p172 = scmp.le.s32.totalorder 1, %s15
      %p173 = scmp.lt.s32.totalorder %s15, 3
      %p174 = pnand %p172, %p173
      %p175 = pneg %p174
      // Predicated region
      $region25: #{tpu_custom_call.1} parent=5 // pred_check
        _
      $region26: #{tpu_custom_call.1} parent=5 // pred_check_branch
        %177 = sbr.rel (%p174) target = $region28
      $region27: #{tpu_custom_call.1} parent=5 // pred_region
        %s178 = ssub.s32 %s15, 1
        // Predicated region
        $region29: #{tpu_custom_call.1} parent=27 // pred_check
          %p179 = pneg %p60
        $region30: #{tpu_custom_call.1} parent=27 // pred_check_branch
          %181 = sbr.rel (%p179) target = $region32
        $region31: #{tpu_custom_call.1} parent=27 // pred_region
          %182 = dma.done [#allocation3], 64
        $region32: #{tpu_custom_call.1} parent=27 // pred_fallthru
          _
        %s183 = sand.u32 %s75, 1
        %s184 = scalar_lea.sflag [#allocation6], %s183
        %s185 = sand.u32 %s75, 1
        %s186 = smul.addr %s185, 16
        %s187 = scalar_lea.vmem [#allocation5], %s186
        // Predicated region
        $region33: #{tpu_custom_call.1} parent=27 // pred_check
          %p188 = pneg %p88
        $region34: #{tpu_custom_call.1} parent=27 // pred_check_branch
          %190 = sbr.rel (%p188) target = $region36
        $region35: #{tpu_custom_call.1} parent=27 // pred_region
          %191 = dma.done %s184, 256
        $region36: #{tpu_custom_call.1} parent=27 // pred_fallthru
          _
        %p192 = pneg %p60
        %p193 = pneg %p57
        %s194 = sand.u32 %s75, 1
        %s195 = scalar_lea.sflag [#allocation6], %s194
        %s196 = sand.u32 %s75, 1
        %s197 = smul.addr %s196, 16
        %s198 = scalar_lea.vmem [#allocation5], %s197
        %p199 = pneg %p88
        %p200 = pneg %p85
        %p201 = pneg %p118
        %p202 = pneg %p115
        %s203 = sand.u32 %s105, 1
        %s204 = scalar_lea.sflag [#allocation4], %s203
        %s205 = sand.u32 %s105, 1
        %s206 = smul.addr %s205, 4
        %s207 = scalar_lea.vmem [#allocation7], %s206
        %v208 = vld [vmem:[#allocation2] sm:$0xf]
        %vm209 = vcmask 125952
        %v210 = vsel %vm209, %v208, -inf
        %211 = vmax.xlane.f32.xlu0 %v210
        %v212 = vpop.xlane.xlu0 %211
        %v213 = vsub.f32 %v208, %v212
        %v214 = vmul.f32 %v213, 1.442695
        %v215 = vpow.pop %v214
        %v216 = vsel %vm209, %v215, 0.0
        %217 = vadd.xlane.f32.xlu0 %v216
        %v218 = vpop.xlane.xlu0 %217
        %v219 = vrcp.pop %v218
        %v220 = vmul.f32 %v215, %v219
        %v221 = vld [vmem:[%s187] sm:$0xff]
        %v222 = vld [vmem:[%s187 + $0x8] sm:$0xff]
        %vm223 = vcmask 130048
        %v225 = vsel %vm223, %v220, 0
        %227 = vmatprep.subr.mxu0 0.0
        %228 = vmatpush1.msra.mxu0 0.0
        %229 = vmatprep.subr.mxu0 0.0
        %230 = vmatpush1.msra.mxu0 0.0
        %231 = vmatprep.subr.mxu0 0.0
        %232 = vmatpush1.msra.mxu0 0.0
        %233 = vmatprep.subr.mxu0 0.0
        %234 = vmatpush1.msra.mxu0 0.0
        %235 = vmatprep.subr.mxu0 0.0
        %236 = vmatpush1.msra.mxu0 0.0
        %237 = vmatprep.subr.mxu0 0.0
        %238 = vmatpush1.msra.mxu0 0.0
        %239 = vmatprep.subr.mxu0 0.0
        %240 = vmatpush1.msra.mxu0 0.0
        %241 = vmatprep.subr.mxu0 0.0
        %242 = vmatpush1.msra.mxu0 0.0
        %243 = vmatprep.subr.mxu0 0.0
        %244 = vmatpush1.msra.mxu0 0.0
        %245 = vmatprep.subr.mxu0 0.0
        %246 = vmatpush1.msra.mxu0 0.0
        %247 = vmatprep.subr.mxu0 0.0
        %248 = vmatpush1.msra.mxu0 0.0
        %249 = vmatprep.subr.mxu0 0.0
        %250 = vmatpush1.msra.mxu0 0.0
        %251 = vmatprep.subr.mxu0 0.0
        %252 = vmatpush1.msra.mxu0 0.0
        %253 = vmatprep.subr.mxu0 0.0
        %254 = vmatpush1.msra.mxu0 0.0
        %255 = vmatprep.subr.mxu0 0.0
        %256 = vmatpush1.msra.mxu0 %v222
        %257 = vmatprep.subr.mxu0 0.0
        %258 = vmatpush1.msra.mxu0 %v221
        %259 = vmatprep.subr.mxu0 0.0
        %260 = vmatpush2.msra.mxu0 0.0
        %261 = vmatprep.subr.mxu0 0.0
        %262 = vmatpush2.msra.mxu0 0.0
        %263 = vmatprep.subr.mxu0 0.0
        %264 = vmatpush2.msra.mxu0 0.0
        %265 = vmatprep.subr.mxu0 0.0
        %266 = vmatpush2.msra.mxu0 0.0
        %267 = vmatprep.subr.mxu0 0.0
        %268 = vmatpush2.msra.mxu0 0.0
        %269 = vmatprep.subr.mxu0 0.0
        %270 = vmatpush2.msra.mxu0 0.0
        %271 = vmatprep.subr.mxu0 0.0
        %272 = vmatpush2.msra.mxu0 0.0
        %273 = vmatprep.subr.mxu0 0.0
        %274 = vmatpush2.msra.mxu0 0.0
        %275 = vmatprep.subr.mxu0 0.0
        %276 = vmatpush2.msra.mxu0 0.0
        %277 = vmatprep.subr.mxu0 0.0
        %278 = vmatpush2.msra.mxu0 0.0
        %279 = vmatprep.subr.mxu0 0.0
        %280 = vmatpush2.msra.mxu0 0.0
        %281 = vmatprep.subr.mxu0 0.0
        %282 = vmatpush2.msra.mxu0 0.0
        %283 = vmatprep.subr.mxu0 0.0
        %284 = vmatpush2.msra.mxu0 0.0
        %285 = vmatprep.subr.mxu0 0.0
        %286 = vmatpush2.msra.mxu0 0.0
        %287 = vmatprep.subr.mxu0 0.0
        %288 = vmatpush2.msra.mxu0 0.0
        %289 = vmatprep.subr.mxu0 0.0
        %290 = vmatpush2.msra.mxu0 0.0
        %291 = vmatprep.mubr.f32.mxu0 0.0
        %292 = vmatmul.mubr.f32.gmra.mxu0 %v225
        %v293 = vpop.f32.mrf.mxu0
        %v294 = vadd.f32 0.0, %v293
        %v295 = vpop.f32.mrf.mxu0
        %296 = vdwg.mxu0
        %vm297 = vcmask 257024
        %298 = vst.msk [vmem:[%s207] sm:$0xf] %vm297, %v294
        %s299 = sand.u32 %s105, 1
        %s300 = scalar_lea.sflag [#allocation4], %s299
        %s301 = sand.u32 %s105, 1
        %s302 = smul.addr %s301, 4
        %s303 = scalar_lea.vmem [#allocation7], %s302
        // Predicated region
        $region37: #{tpu_custom_call.1} parent=27 // pred_check
          %p304 = pneg %p115
        $region38: #{tpu_custom_call.1} parent=27 // pred_check_branch
          %306 = sbr.rel (%p304) target = $region40
        $region39: #{tpu_custom_call.1} parent=27 // pred_region
          %s308 = ssub.s32 64, 64
          %309 = vsyncadd %s300, %s308
          %s310 = sadd.s32 %s27, %s26
          %s311 = sadd.s32 %s310, %s25
          %s312 = smul.addr %s311, 64
          %s313 = scalar_lea.hbm %s2, %s312
          %s315 = sshll.u32 %s303, 4
          %s316 = int_to_ptr.vmem [resolvable:$true] %s315
          %318 = dma.vmem_to_hbm [thread:$0]  %s316, 64, %s313, %s300
        $region40: #{tpu_custom_call.1} parent=27 // pred_fallthru
          _
      $region28: #{tpu_custom_call.1} parent=5 // pred_fallthru
        _
      %p319 = scmp.le.s32.totalorder 2, %s15
      // Predicated region
      $region41: #{tpu_custom_call.1} parent=5 // pred_check
        %p320 = pneg %p319
      $region42: #{tpu_custom_call.1} parent=5 // pred_check_branch
        %322 = sbr.rel (%p320) target = $region44
      $region43: #{tpu_custom_call.1} parent=5 // pred_region
        %s323 = ssub.s32 %s15, 2
        // Predicated region
        $region45: #{tpu_custom_call.1} parent=43 // pred_check
          %p324 = pneg %p121
        $region46: #{tpu_custom_call.1} parent=43 // pred_check_branch
          %326 = sbr.rel (%p324) target = $region48
        $region47: #{tpu_custom_call.1} parent=43 // pred_region
          %s327 = sand.u32 %s106, 1
          %s328 = scalar_lea.sflag [#allocation4], %s327
          %s329 = sand.u32 %s106, 1
          %s330 = smul.addr %s329, 4
          %s331 = scalar_lea.vmem [#allocation7], %s330
          %332 = dma.done %s328, 64
        $region48: #{tpu_custom_call.1} parent=43 // pred_fallthru
          _
      $region44: #{tpu_custom_call.1} parent=5 // pred_fallthru
        _
    $region6: #{tpu_custom_call.1} parent=1 // loop_footer
      %s19 = sadd.s32 1, %s15
    $region7: #{tpu_custom_call.1} parent=1 // loop_footer_branch
      %14 = sbr.rel target = $region3
    $region8: #{tpu_custom_call.1} parent=1 // loop_exit
      _
    %333 = vsyncpa [#allocation3], 1
    %s334 = scalar_lea.sflag [#allocation3], 1
    %335 = vsyncpa %s334, 1
    %336 = vsyncpa [#allocation6], 1
    %s337 = scalar_lea.sflag [#allocation6], 1
    %338 = vsyncpa %s337, 1
    %339 = vsyncpa [#allocation4], 1
    %s340 = scalar_lea.sflag [#allocation4], 1
    %341 = vsyncpa %s340, 1

</llo_original>
